<compile_context>
chip_gen: v7x
topology: tpu7x:2x2x1
jax: 0.10.0
libtpu: 0.0.40
codegen_flags: <defaults>
</compile_context>

<pallas_src>
import functools

import jax
import jax.numpy as jnp
from jax.experimental import pallas as pl
from jax.experimental.pallas import tpu as pltpu

LN_EPS = 1e-5  # nn.LayerNorm default


def _round_up(a: int, b: int) -> int:
    return (a + b - 1) // b * b


def _patch_embed_kernel(p_ref, w_ref, prm_ref, o_ref, *, inv_e: float,
                        precision=None):
    """p_ref: (TM, K); w_ref: (K, E); prm_ref: (3, E) = [bias; gamma; beta];
    o_ref: (TM, E).

    Note on the partial last row tile: rows past M hold stale VMEM data, but
    every op here is row-independent and rsqrt(var + eps) stays finite, and
    Pallas writes back only the in-bounds rows, so nothing leaks.
    """
    # MXU matmul in the operands' native dtype (bf16 by default), f32 accum.
    x = jnp.dot(p_ref[...], w_ref[...], preferred_element_type=jnp.float32,
                precision=precision)

    prm = prm_ref[...]            # already float32
    bias = prm[0:1, :]
    gamma = prm[1:2, :]
    beta = prm[2:3, :]

    x = x + bias

    # LayerNorm over embed_dim: two independent lane reductions,
    # var = E[x^2] - mean^2 (post-bias activations are O(1), cancellation is
    # negligible relative to eps).
    s1 = jnp.sum(x, axis=-1, keepdims=True)
    s2 = jnp.sum(x * x, axis=-1, keepdims=True)
    mean = s1 * inv_e
    var = s2 * inv_e - mean * mean

    scale = jax.lax.rsqrt(var + LN_EPS) * gamma   # gamma folded into the scale
    o_ref[...] = ((x - mean) * scale + beta).astype(o_ref.dtype)


def prepare_patch_embed_params(conv_w, conv_b, ln_gamma, ln_beta, mxu_dtype):
    """One-time (module-init) parameter prep.

    Returns (w_mat, params): w_mat is the (K, E) matmul matrix in the MXU feed
    dtype; params is the fused (3, E) f32 block [bias; gamma; beta] (one DMA).
    """
    E = conv_w.shape[0]
    w_mat = conv_w.reshape(E, -1).T.astype(mxu_dtype)
    params = jnp.stack([conv_b, ln_gamma, ln_beta]).astype(jnp.float32)
    return w_mat, params


def patch_embed_forward(x, conv_w, conv_b, ln_gamma, ln_beta, patch_size, *,
                        tm=1024, mxu_dtype=jnp.bfloat16, precision=None):
    """x: (B, C, H, W) NCHW; conv_w: (E, C, ph, pw); conv_b/ln_*: (E,).

    Returns (out, (H_p, W_p)) with out of shape (B, H_p*W_p, E) in x.dtype.
    mxu_dtype: dtype the patches/weight are fed to the MXU in (None -> x.dtype).
    """
    B, C, H, W = x.shape
    ph, pw = patch_size
    E = conv_w.shape[0]
    assert H % ph == 0 and W % pw == 0, "img_size must be divisible by patch_size"
    Hp, Wp = H // ph, W // pw
    N = Hp * Wp
    K = C * ph * pw
    M = B * N

    in_dtype = jnp.dtype(mxu_dtype) if mxu_dtype is not None else jnp.dtype(x.dtype)
    out_dtype = jnp.dtype(x.dtype)
    in_item = in_dtype.itemsize
    out_item = out_dtype.itemsize

    # Non-overlapping patch extraction to (M, K), inner order (c, i, j) to
    # match nn.Conv2d weight flattening.  Cast first so the XLA transpose pass
    # (see TODO above) reads f32 once and writes the narrow dtype.
    patches = (
        x.astype(in_dtype)
        .reshape(B, C, Hp, ph, Wp, pw)
        .transpose(0, 2, 4, 1, 3, 5)
        .reshape(M, K)
    )

    # In a real module these are prepared once at __init__.
    w_mat, params = prepare_patch_embed_params(conv_w, conv_b, ln_gamma,
                                               ln_beta, in_dtype)

    # Row tile: multiple of the sublane packing of every operand dtype, sized
    # from an explicit VMEM budget for the double-buffered in/out tiles, and
    # capped so the grid has >= 2 steps (megacore split on v7x + pipelining).
    row_mult = max(8, 32 // in_item, 32 // out_item)
    bytes_per_row = 2 * (K * in_item + E * out_item)          # double-buffered
    tile_budget = 12 * 1024 * 1024
    tm_vmem_cap = max(row_mult,
                      (tile_budget // bytes_per_row) // row_mult * row_mult)
    tm_core_cap = max(row_mult, _round_up(pl.cdiv(M, 2), row_mult))
    TM = min(int(tm), tm_vmem_cap, tm_core_cap)
    TM = max(row_mult, (TM // row_mult) * row_mult)
    grid = (pl.cdiv(M, TM),)

    # Raise the scoped VMEM limit only when the estimate exceeds the most
    # conservative default (v5e: 16 MiB); stay well under v7x's 64 MiB.
    est_vmem = TM * bytes_per_row + 2 * (K * E * in_item + 3 * E * 4)
    vmem_limit = None
    if est_vmem > 12 * 1024 * 1024:
        vmem_limit = int(min(2 * est_vmem, 48 * 1024 * 1024))

    cost = pl.CostEstimate(
        flops=2 * M * K * E,
        transcendentals=M,                       # one rsqrt per patch row
        bytes_accessed=(M * K * in_item + K * E * in_item + 3 * E * 4
                        + M * E * out_item),
    )

    out_flat = pl.pallas_call(
        functools.partial(_patch_embed_kernel, inv_e=1.0 / float(E),
                          precision=precision),
        out_shape=jax.ShapeDtypeStruct((M, E), out_dtype),
        grid_spec=pltpu.PrefetchScalarGridSpec(
            num_scalar_prefetch=0,
            grid=grid,
            in_specs=[
                pl.BlockSpec((TM, K), lambda i: (i, 0)),   # patch tile (pipelined)
                pl.BlockSpec((K, E), lambda i: (0, 0)),    # weight (VMEM-resident)
                pl.BlockSpec((3, E), lambda i: (0, 0)),    # bias/gamma/beta
            ],
            out_specs=pl.BlockSpec((TM, E), lambda i: (i, 0)),
        ),
        compiler_params=pltpu.CompilerParams(
            dimension_semantics=("parallel",),
            vmem_limit_bytes=vmem_limit,
        ),
        cost_estimate=cost,
    )(patches, w_mat, params)

    out = out_flat.reshape(B, N, E)   # free reshape; no post-kernel slice pass
    return out, (Hp, Wp)


def _reference(x, conv_w, conv_b, ln_gamma, ln_beta, patch_size, mxu_dtype=None):
    B, C, H, W = x.shape
    ph, pw = patch_size
    E = conv_w.shape[0]
    Hp, Wp = H // ph, W // pw
    patches = (
        x.reshape(B, C, Hp, ph, Wp, pw)
        .transpose(0, 2, 4, 1, 3, 5)
        .reshape(B, Hp * Wp, -1)
    )
    w = conv_w.reshape(E, -1)
    if mxu_dtype is not None:       # mimic the kernel's operand quantization
        patches = patches.astype(mxu_dtype).astype(jnp.float32)
        w = w.astype(mxu_dtype).astype(jnp.float32)
    proj = patches.astype(jnp.float32) @ w.T.astype(jnp.float32) + conv_b
    mu = proj.mean(-1, keepdims=True)
    var = ((proj - mu) ** 2).mean(-1, keepdims=True)
    return (proj - mu) / jnp.sqrt(var + LN_EPS) * ln_gamma + ln_beta


if __name__ == "__main__":
    # Small config consistent with the module: img 16x16, patch 4, C=4, E=32.
    B, C, H, W = 2, 4, 16, 16
    patch_size = (4, 4)
    E = 32

    key = jax.random.PRNGKey(0)
    kx, kw, kb, kg, kbe = jax.random.split(key, 5)

    x = jax.random.normal(kx, (B, C, H, W), dtype=jnp.float32)
    conv_w = jax.random.normal(kw, (E, C, patch_size[0], patch_size[1]),
                               dtype=jnp.float32) * 0.05
    conv_b = jax.random.normal(kb, (E,), dtype=jnp.float32) * 0.05
    ln_gamma = jnp.ones((E,), jnp.float32) + 0.1 * jax.random.normal(kg, (E,))
    ln_beta = 0.1 * jax.random.normal(kbe, (E,), dtype=jnp.float32)

    # (1) Exact f32 MXU feeding: tight parity with the module math.
    out_f32, (Hp, Wp) = patch_embed_forward(
        x, conv_w, conv_b, ln_gamma, ln_beta, patch_size,
        mxu_dtype=jnp.float32)
    jax.block_until_ready(out_f32)
    ref = _reference(x, conv_w, conv_b, ln_gamma, ln_beta, patch_size)
    assert out_f32.shape == (B, Hp * Wp, E)
    assert (Hp, Wp) == (H // patch_size[0], W // patch_size[1])
    assert jnp.allclose(out_f32, ref, atol=1e-4, rtol=1e-4)

    # (2) Default bf16 MXU feeding (f32 accumulation + f32 LayerNorm).
    out_bf16, _ = patch_embed_forward(
        x, conv_w, conv_b, ln_gamma, ln_beta, patch_size)
    jax.block_until_ready(out_bf16)
    ref_q = _reference(x, conv_w, conv_b, ln_gamma, ln_beta, patch_size,
                       mxu_dtype=jnp.bfloat16)
    assert jnp.allclose(out_bf16, ref_q, atol=2e-3, rtol=2e-3)
    assert jnp.allclose(out_bf16, ref, atol=5e-2, rtol=5e-2)  # quantization bound

    # (3) Multiple grid steps, non-divisible last row tile, E not a multiple
    # of 128 (exercises the unpadded masked-store output path).
    B2, C2, H2, W2, E2 = 2, 3, 40, 40, 48
    ps2 = (4, 4)
    k2 = jax.random.split(jax.random.PRNGKey(1), 5)
    x2 = jax.random.normal(k2[0], (B2, C2, H2, W2), dtype=jnp.float32)
    w2 = jax.random.normal(k2[1], (E2, C2, ps2[0], ps2[1]), jnp.float32) * 0.05
    b2 = jax.random.normal(k2[2], (E2,), jnp.float32) * 0.05
    g2 = jnp.ones((E2,), jnp.float32) + 0.1 * jax.random.normal(k2[3], (E2,))
    be2 = 0.1 * jax.random.normal(k2[4], (E2,), dtype=jnp.float32)

    out2, (Hp2, Wp2) = patch_embed_forward(x2, w2, b2, g2, be2, ps2, tm=64)
    jax.block_until_ready(out2)
    ref2 = _reference(x2, w2, b2, g2, be2, ps2, mxu_dtype=jnp.bfloat16)
    assert out2.shape == (B2, Hp2 * Wp2, E2)
    assert jnp.allclose(out2, ref2, atol=2e-3, rtol=2e-3)

    print("KERNEL_OK")
</pallas_src>

<mosaic_0001>
module attributes {stable_mosaic.version = 11 : i64} {
  func.func @_patch_embed_kernel(%arg0: i32, %arg1: memref<16x64xf32, #tpu.memory_space<vmem>>, %arg2: memref<64x32xf32, #tpu.memory_space<vmem>>, %arg3: memref<3x32xf32, #tpu.memory_space<vmem>>, %arg4: memref<16x32xf32, #tpu.memory_space<vmem>>) attributes {dimension_semantics = [#tpu.dimension_semantics<parallel>], iteration_bounds = array<i64: 2>, scalar_prefetch = 0 : i64, scratch_operands = 0 : i64, tpu.core_type = #tpu.core_type<tc>, window_params = [{transform_indices = @transform_0, window_bounds = array<i64: 16, 64>}, {pipeline_mode = #tpu.pipeline_mode<synchronous>, transform_indices = @transform_1, window_bounds = array<i64: 64, 32>}, {pipeline_mode = #tpu.pipeline_mode<synchronous>, transform_indices = @transform_2, window_bounds = array<i64: 3, 32>}, {transform_indices = @transform_3, window_bounds = array<i64: 16, 32>}]} {
    %c0 = arith.constant 0 : index
    %c0_0 = arith.constant 0 : index
    %0 = vector.load %arg1[%c0, %c0_0] : memref<16x64xf32, #tpu.memory_space<vmem>>, vector<16x64xf32>
    %c0_1 = arith.constant 0 : index
    %c0_2 = arith.constant 0 : index
    %1 = vector.load %arg2[%c0_1, %c0_2] : memref<64x32xf32, #tpu.memory_space<vmem>>, vector<64x32xf32>
    %cst = arith.constant dense<0.000000e+00> : vector<16x32xf32>
    %2 = tpu.matmul %0, %1, %cst {dimension_numbers = #tpu.dot_dimension_numbers<[1], [0], [0], [1], [0, 0, 1, 1], [], []>} : vector<16x64xf32>, vector<64x32xf32>, vector<16x32xf32> -> vector<16x32xf32>
    %c0_3 = arith.constant 0 : index
    %c0_4 = arith.constant 0 : index
    %3 = vector.load %arg3[%c0_3, %c0_4] : memref<3x32xf32, #tpu.memory_space<vmem>>, vector<3x32xf32>
    %4 = vector.extract_strided_slice %3 {offsets = [0, 0], sizes = [1, 32], strides = [1, 1]} : vector<3x32xf32> to vector<1x32xf32>
    %5 = vector.extract_strided_slice %3 {offsets = [1, 0], sizes = [1, 32], strides = [1, 1]} : vector<3x32xf32> to vector<1x32xf32>
    %6 = vector.extract_strided_slice %3 {offsets = [2, 0], sizes = [1, 32], strides = [1, 1]} : vector<3x32xf32> to vector<1x32xf32>
    %7 = vector.broadcast %4 : vector<1x32xf32> to vector<16x32xf32>
    %8 = arith.addf %2, %7 : vector<16x32xf32>
    %cst_5 = arith.constant dense<0.000000e+00> : vector<16xf32>
    %9 = vector.multi_reduction <add>, %8, %cst_5 [1] : vector<16x32xf32> to vector<16xf32>
    %10 = vector.shape_cast %9 : vector<16xf32> to vector<16x1xf32>
    %11 = arith.mulf %8, %8 : vector<16x32xf32>
    %cst_6 = arith.constant dense<0.000000e+00> : vector<16xf32>
    %12 = vector.multi_reduction <add>, %11, %cst_6 [1] : vector<16x32xf32> to vector<16xf32>
    %13 = vector.shape_cast %12 : vector<16xf32> to vector<16x1xf32>
    %cst_7 = arith.constant 3.125000e-02 : f32
    %14 = vector.broadcast %cst_7 : f32 to vector<16x1xf32>
    %15 = arith.mulf %10, %14 : vector<16x1xf32>
    %cst_8 = arith.constant 3.125000e-02 : f32
    %16 = vector.broadcast %cst_8 : f32 to vector<16x1xf32>
    %17 = arith.mulf %13, %16 : vector<16x1xf32>
    %18 = arith.mulf %15, %15 : vector<16x1xf32>
    %19 = arith.subf %17, %18 : vector<16x1xf32>
    %cst_9 = arith.constant 9.99999974E-6 : f32
    %20 = vector.broadcast %cst_9 : f32 to vector<16x1xf32>
    %21 = arith.addf %19, %20 : vector<16x1xf32>
    %22 = math.rsqrt %21 : vector<16x1xf32>
    %23 = vector.broadcast %22 : vector<16x1xf32> to vector<16x32xf32>
    %24 = vector.broadcast %5 : vector<1x32xf32> to vector<16x32xf32>
    %25 = arith.mulf %23, %24 : vector<16x32xf32>
    %26 = vector.broadcast %15 : vector<16x1xf32> to vector<16x32xf32>
    %27 = arith.subf %8, %26 : vector<16x32xf32>
    %28 = arith.mulf %27, %25 : vector<16x32xf32>
    %29 = vector.broadcast %6 : vector<1x32xf32> to vector<16x32xf32>
    %30 = arith.addf %28, %29 : vector<16x32xf32>
    %c0_10 = arith.constant 0 : index
    %c0_11 = arith.constant 0 : index
    %31 = vector.load %arg4[%c0_10, %c0_11] : memref<16x32xf32, #tpu.memory_space<vmem>>, vector<16x32xf32>
    tpu.vector_store %arg4[%c0_10, %c0_11], %30 {strides = array<i32>} : memref<16x32xf32, #tpu.memory_space<vmem>>, vector<16x32xf32>,
    return
  }
  func.func @transform_0(%arg0: i32) -> (i32, i32) {
    %c0_i32 = arith.constant 0 : i32
    %c0_i32_0 = arith.constant 0 : i32
    return %arg0, %c0_i32 : i32, i32
  }
  func.func @transform_1(%arg0: i32) -> (i32, i32) {
    %c0_i32 = arith.constant 0 : i32
    %c0_i32_0 = arith.constant 0 : i32
    %c0_i32_1 = arith.constant 0 : i32
    return %c0_i32, %c0_i32_0 : i32, i32
  }
  func.func @transform_2(%arg0: i32) -> (i32, i32) {
    %c0_i32 = arith.constant 0 : i32
    %c0_i32_0 = arith.constant 0 : i32
    %c0_i32_1 = arith.constant 0 : i32
    return %c0_i32, %c0_i32_0 : i32, i32
  }
  func.func @transform_3(%arg0: i32) -> (i32, i32) {
    %c0_i32 = arith.constant 0 : i32
    %c0_i32_0 = arith.constant 0 : i32
    return %arg0, %c0_i32 : i32, i32
  }
}

</mosaic_0001>

<llo_original>
// kernel: tpu_custom_call.1
$region0: #{tpu_custom_call.1}
  #allocation0 [shape = 'u32[]', space=smem, size = 0x4, offset = 0x4, fixed_abs, tag = 'smem constant byte address 0x4 - core index']
  #allocation1 [shape = 'u32[144,128]{1,0:T(1,128)}', space=vmem, size = 0x12000, scoped, tag = 'internal scratch']
  %s0 = inlined_call_operand.vmem [shape: f32[32,64], index: 0, kind: input, shape index: {}]
  %s1 = inlined_call_operand.vmem [shape: f32[64,32], index: 1, kind: input, shape index: {}]
  %s2 = inlined_call_operand.vmem [shape: f32[3,32], index: 2, kind: input, shape index: {}]
  %s3 = inlined_call_operand.hbm [shape: f32[32,32], index: 3, kind: output, shape index: {}]
  %s4 = sld [smem:[#allocation0]]
  $region45: #{tpu_custom_call.1} parent=0
    _
  %s6 = ssub.s32 1, %s4
  %s7 = scalar_select 0, %s6, %s4
  $region1: #{tpu_custom_call.1} parent=0
    #allocation2 [shape = 'u8[16384]{0}', space=vmem, size = 0x4000, scoped, tag = 'output window, operand 0']
    #allocation3 [shape = 's32[2]{0}', space=sflag, size = 0x8, scoped, tag = 'scoped memory for tpu_custom_call.1']
    %8 = vsyncpa [#allocation3], 0
    %s9 = scalar_lea.sflag [#allocation3], 1
    %10 = vsyncpa %s9, 0
    loop: start=0, step=1, limit=4
    $region2: #{tpu_custom_call.1} parent=1 // loop_pre_header
      _
    $region3: #{tpu_custom_call.1} parent=1 // loop_header
      %s12 = sphi 0, %s16
      %p13 = scmp.ge.s32.totalorder %s12, 4
      %s22 = sphi 0, %s24
      %s25 = sphi 0, %s22
      %s26 = sphi 0, %s25
      %s42 = sphi 0, %s26
      %s46 = sphi 0, %s46
      %s48 = sphi 0, %s46
      %s49 = sphi 0, %s48
      %s63 = sphi 0, %s49
      %s67 = sphi 0, %s67
      %s69 = sphi 0, %s67
      %s70 = sphi 0, %s69
      %s84 = sphi 0, %s70
      %s90 = sphi 0, %s92
      %s93 = sphi 0, %s90
      %s94 = sphi 0, %s93
      %s110 = sphi 0, %s94
    $region4: #{tpu_custom_call.1} parent=1 // loop_header_branch
      %15 = sbr.rel (%p13) target = $region8
    $region5: #{tpu_custom_call.1} parent=1 // loop_body
      %s17 = ssub.s32 %s12, 1
      %s18 = ssub.s32 %s12, 2
      %s19 = sadd.s32 %s12, 1
      %s20 = ssub.s32 %s12, %s19
      %p21 = scmp.eq.s32.totalorder %s20, 0
      %s23 = sadd.s32 %s22, 1
      %s24 = scalar_select %p21, %s22, %s23
      %p27 = pneg %p21
      %p28 = scmp.eq.s32.totalorder %s12, 1
      %p29 = por %p27, %p28
      %p30 = scmp.ne.s32.totalorder %s22, %s25
      %p31 = scmp.eq.s32.totalorder %s12, 0
      %p32 = por %p30, %p31
      %p33 = scmp.ne.s32.totalorder %s22, %s25
      %p34 = scmp.eq.s32.totalorder %s17, 1
      %p35 = por %p33, %p34
      %p36 = scmp.ne.s32.totalorder %s25, %s26
      %p37 = scmp.eq.s32.totalorder %s17, 0
      %p38 = por %p36, %p37
      %p39 = scmp.ne.s32.totalorder %s25, %s26
      %p40 = scmp.eq.s32.totalorder %s18, 1
      %p41 = por %p39, %p40
      %p43 = scmp.ne.s32.totalorder %s26, %s42
      %p44 = scmp.eq.s32.totalorder %s18, 0
      %p45 = por %p43, %p44
      %s47 = sadd.s32 %s46, 1
      %p50 = scmp.eq.s32.totalorder %s12, 1
      %p51 = scmp.ne.s32.totalorder %s46, %s48
      %p52 = scmp.eq.s32.totalorder %s12, 0
      %p53 = por %p51, %p52
      %p54 = scmp.ne.s32.totalorder %s46, %s48
      %p55 = scmp.eq.s32.totalorder %s17, 1
      %p56 = por %p54, %p55
      %p57 = scmp.ne.s32.totalorder %s48, %s49
      %p58 = scmp.eq.s32.totalorder %s17, 0
      %p59 = por %p57, %p58
      %p60 = scmp.ne.s32.totalorder %s48, %s49
      %p61 = scmp.eq.s32.totalorder %s18, 1
      %p62 = por %p60, %p61
      %p64 = scmp.ne.s32.totalorder %s49, %s63
      %p65 = scmp.eq.s32.totalorder %s18, 0
      %p66 = por %p64, %p65
      %s68 = sadd.s32 %s67, 1
      %p71 = scmp.eq.s32.totalorder %s12, 1
      %p72 = scmp.ne.s32.totalorder %s67, %s69
      %p73 = scmp.eq.s32.totalorder %s12, 0
      %p74 = por %p72, %p73
      %p75 = scmp.ne.s32.totalorder %s67, %s69
      %p76 = scmp.eq.s32.totalorder %s17, 1
      %p77 = por %p75, %p76
      %p78 = scmp.ne.s32.totalorder %s69, %s70
      %p79 = scmp.eq.s32.totalorder %s17, 0
      %p80 = por %p78, %p79
      %p81 = scmp.ne.s32.totalorder %s69, %s70
      %p82 = scmp.eq.s32.totalorder %s18, 1
      %p83 = por %p81, %p82
      %p85 = scmp.ne.s32.totalorder %s70, %s84
      %p86 = scmp.eq.s32.totalorder %s18, 0
      %p87 = por %p85, %p86
      %s88 = ssub.s32 %s12, %s19
      %p89 = scmp.eq.s32.totalorder %s88, 0
      %s91 = sadd.s32 %s90, 1
      %s92 = scalar_select %p89, %s90, %s91
      %p95 = pneg %p89
      %p96 = scmp.eq.s32.totalorder %s12, 1
      %p97 = por %p95, %p96
      %p98 = scmp.ne.s32.totalorder %s90, %s93
      %p99 = scmp.eq.s32.totalorder %s12, 0
      %p100 = por %p98, %p99
      %p101 = scmp.ne.s32.totalorder %s90, %s93
      %p102 = scmp.eq.s32.totalorder %s17, 1
      %p103 = por %p101, %p102
      %p104 = scmp.ne.s32.totalorder %s93, %s94
      %p105 = scmp.eq.s32.totalorder %s17, 0
      %p106 = por %p104, %p105
      %p107 = scmp.ne.s32.totalorder %s93, %s94
      %p108 = scmp.eq.s32.totalorder %s18, 1
      %p109 = por %p107, %p108
      %p111 = scmp.ne.s32.totalorder %s94, %s110
      %p112 = scmp.eq.s32.totalorder %s18, 0
      %p113 = por %p111, %p112
      %p114 = scmp.le.s32.totalorder 1, %s12
      %p115 = scmp.lt.s32.totalorder %s12, 3
      %p116 = pnand %p114, %p115
      %p117 = pneg %p116
      // Predicated region
      $region9: #{tpu_custom_call.1} parent=5 // pred_check
        _
      $region10: #{tpu_custom_call.1} parent=5 // pred_check_branch
        %119 = sbr.rel (%p116) target = $region12
      $region11: #{tpu_custom_call.1} parent=5 // pred_region
        %s120 = ssub.s32 %s12, 1
        // Predicated region
        $region13: #{tpu_custom_call.1} parent=11 // pred_check
          %p121 = pneg %p59
        $region14: #{tpu_custom_call.1} parent=11 // pred_check_branch
          %123 = sbr.rel (%p121) target = $region16
        $region15: #{tpu_custom_call.1} parent=11 // pred_region
          _
        $region16: #{tpu_custom_call.1} parent=11 // pred_fallthru
          _
        // Predicated region
        $region17: #{tpu_custom_call.1} parent=11 // pred_check
          %p124 = pneg %p80
        $region18: #{tpu_custom_call.1} parent=11 // pred_check_branch
          %126 = sbr.rel (%p124) target = $region20
        $region19: #{tpu_custom_call.1} parent=11 // pred_region
          _
        $region20: #{tpu_custom_call.1} parent=11 // pred_fallthru
          _
      $region12: #{tpu_custom_call.1} parent=5 // pred_fallthru
        _
      %p127 = scmp.lt.s32.totalorder %s12, 2
      // Predicated region
      $region21: #{tpu_custom_call.1} parent=5 // pred_check
        %p128 = pneg %p127
      $region22: #{tpu_custom_call.1} parent=5 // pred_check_branch
        %130 = sbr.rel (%p128) target = $region24
      $region23: #{tpu_custom_call.1} parent=5 // pred_region
        // Predicated region
        $region25: #{tpu_custom_call.1} parent=23 // pred_check
          %p131 = pneg %p32
        $region26: #{tpu_custom_call.1} parent=23 // pred_check_branch
          %133 = sbr.rel (%p131) target = $region28
        $region27: #{tpu_custom_call.1} parent=23 // pred_region
          %s134 = smul.u32 2, %s12
          %p135 = scmp.lt.s32.totalorder %s134, 3
          %s136 = scalar_select %p135, %s134, 3
          %s137 = smul.addr %s136, 8
          %s138 = scalar_lea.vmem %s0, %s137
          %s139 = smul.u32 2, %s12
        $region28: #{tpu_custom_call.1} parent=23 // pred_fallthru
          _
      $region24: #{tpu_custom_call.1} parent=5 // pred_fallthru
        _
      %p140 = scmp.le.s32.totalorder 1, %s12
      %p141 = scmp.lt.s32.totalorder %s12, 3
      %p142 = pnand %p140, %p141
      %p143 = pneg %p142
      // Predicated region
      $region29: #{tpu_custom_call.1} parent=5 // pred_check
        _
      $region30: #{tpu_custom_call.1} parent=5 // pred_check_branch
        %145 = sbr.rel (%p142) target = $region32
      $region31: #{tpu_custom_call.1} parent=5 // pred_region
        %s146 = ssub.s32 %s12, 1
        %s147 = smul.u32 2, %s17
        %p148 = scmp.lt.s32.totalorder %s147, 3
        %s149 = scalar_select %p148, %s147, 3
        %s150 = smul.addr %s149, 8
        %s151 = scalar_lea.vmem %s0, %s150
        %p152 = pneg %p38
        %p153 = pneg %p35
        %p154 = pneg %p59
        %p155 = pneg %p56
        %p156 = pneg %p80
        %p157 = pneg %p77
        %p158 = pneg %p106
        %p159 = pneg %p103
        %s160 = sand.u32 %s93, 1
        %s161 = scalar_lea.sflag [#allocation3], %s160
        %s162 = sand.u32 %s93, 1
        %s163 = smul.addr %s162, 16
        %s164 = scalar_lea.vmem [#allocation2], %s163
        %s165 = smul.u32 2, %s17
        %p166 = scmp.lt.s32.totalorder %s165, 3
        %s167 = scalar_select %p166, %s165, 3
        %s168 = smul.addr %s167, 8
        %s169 = scalar_lea.vmem %s0, %s168
        %s170 = smul.u32 2, %s17
        %s171 = smul.u32 2, %s17
        %v172 = vld [vmem:[%s169] sm:$0xff]
        %v173 = vld [vmem:[%s169 + $0x8] sm:$0xff]
        %v174 = vld [vmem:[%s1] sm:$0xff]
        %v175 = vld [vmem:[%s1 + $0x8] sm:$0xff]
        %v176 = vld [vmem:[%s1 + $0x10] sm:$0xff]
        %v177 = vld [vmem:[%s1 + $0x18] sm:$0xff]
        %v178 = vld [vmem:[%s1 + $0x20] sm:$0xff]
        %v179 = vld [vmem:[%s1 + $0x28] sm:$0xff]
        %v180 = vld [vmem:[%s1 + $0x30] sm:$0xff]
        %v181 = vld [vmem:[%s1 + $0x38] sm:$0xff]
        %v182 = vld [vmem:[%s2] sm:$0x7]
        %v183 = vlaneseq
        %v184 = vshrl.u32 %v183, 7
        %v185 = vsub.s32 0, %v184
        %v186 = vrot.slane %v182, %v185
        %vm187 = vcmask 523264
        %v189 = vsel %vm187, %v172, 0
        %v192 = vsel %vm187, %v173, 0
        %194 = vmatprep.subr.mxu0 0.0
        %195 = vmatpush1.msra.mxu0 %v174
        %196 = vmatprep.subr.mxu0 0.0
        %197 = vmatpush1.msra.mxu0 %v175
        %198 = vmatprep.subr.mxu0 0.0
        %199 = vmatpush1.msra.mxu0 %v176
        %200 = vmatprep.subr.mxu0 0.0
        %201 = vmatpush1.msra.mxu0 %v177
        %202 = vmatprep.subr.mxu0 0.0
        %203 = vmatpush1.msra.mxu0 %v178
        %204 = vmatprep.subr.mxu0 0.0
        %205 = vmatpush1.msra.mxu0 %v179
        %206 = vmatprep.subr.mxu0 0.0
        %207 = vmatpush1.msra.mxu0 %v180
        %208 = vmatprep.subr.mxu0 0.0
        %209 = vmatpush1.msra.mxu0 %v181
        %210 = vmatprep.subr.mxu0 0.0
        %211 = vmatpush1.msra.mxu0 0.0
        %212 = vmatprep.subr.mxu0 0.0
        %213 = vmatpush1.msra.mxu0 0.0
        %214 = vmatprep.subr.mxu0 0.0
        %215 = vmatpush1.msra.mxu0 0.0
        %216 = vmatprep.subr.mxu0 0.0
        %217 = vmatpush1.msra.mxu0 0.0
        %218 = vmatprep.subr.mxu0 0.0
        %219 = vmatpush1.msra.mxu0 0.0
        %220 = vmatprep.subr.mxu0 0.0
        %221 = vmatpush1.msra.mxu0 0.0
        %222 = vmatprep.subr.mxu0 0.0
        %223 = vmatpush1.msra.mxu0 0.0
        %224 = vmatprep.subr.mxu0 0.0
        %225 = vmatpush1.msra.mxu0 0.0
        %226 = vmatprep.subr.mxu0 0.0
        %227 = vmatpush1.msra.mxu0 0.0
        %228 = vmatprep.subr.mxu0 0.0
        %229 = vmatpush1.msra.mxu0 0.0
        %230 = vmatprep.subr.mxu0 0.0
        %231 = vmatpush1.msra.mxu0 0.0
        %232 = vmatprep.subr.mxu0 0.0
        %233 = vmatpush1.msra.mxu0 0.0
        %234 = vmatprep.subr.mxu0 0.0
        %235 = vmatpush1.msra.mxu0 0.0
        %236 = vmatprep.subr.mxu0 0.0
        %237 = vmatpush1.msra.mxu0 0.0
        %238 = vmatprep.subr.mxu0 0.0
        %239 = vmatpush1.msra.mxu0 0.0
        %240 = vmatprep.subr.mxu0 0.0
        %241 = vmatpush1.msra.mxu0 0.0
        %242 = vmatprep.subr.mxu0 0.0
        %243 = vmatpush1.msra.mxu0 0.0
        %244 = vmatprep.subr.mxu0 0.0
        %245 = vmatpush1.msra.mxu0 0.0
        %246 = vmatprep.subr.mxu0 0.0
        %247 = vmatpush1.msra.mxu0 0.0
        %248 = vmatprep.subr.mxu0 0.0
        %249 = vmatpush1.msra.mxu0 0.0
        %250 = vmatprep.subr.mxu0 0.0
        %251 = vmatpush1.msra.mxu0 0.0
        %252 = vmatprep.subr.mxu0 0.0
        %253 = vmatpush1.msra.mxu0 0.0
        %254 = vmatprep.subr.mxu0 0.0
        %255 = vmatpush1.msra.mxu0 0.0
        %256 = vmatprep.subr.mxu0 0.0
        %257 = vmatpush1.msra.mxu0 0.0
        %258 = vmatprep.mubr.f32.mxu0 0.0
        %259 = vmatmul.mubr.f32.gmra.mrb[0].mxu0 %v189
        %v260 = vpop.f32.mrb[0].mxu0
        %v261 = vadd.f32 %v186, %v260
        %v262 = vpop.f32.mrb[0].mxu0
        %263 = vmatprep.mubr.f32.mxu0 0.0
        %264 = vmatmul.mubr.f32.gmra.mrb[0].mxu0 %v192
        %v265 = vpop.f32.mrb[0].mxu0
        %v266 = vadd.f32 %v186, %v265
        %v267 = vpop.f32.mrb[0].mxu0
        %268 = vdwg.mxu0
        %vm269 = vcmask 261120
        %v270 = vsel %vm269, %v261, 0.0
        %271 = vadd.xlane.f32.xlu0 %v270
        %v272 = vpop.xlane.xlu0 %271
        %v273 = vsel %vm269, %v266, 0.0
        %274 = vadd.xlane.f32.xlu0 %v273
        %v275 = vpop.xlane.xlu0 %274
        %v276 = vmul.f32 %v261, %v261
        %v277 = vmul.f32 %v266, %v266
        %v278 = vsel %vm269, %v276, 0.0
        %279 = vadd.xlane.f32.xlu0 %v278
        %v280 = vpop.xlane.xlu0 %279
        %v281 = vsel %vm269, %v277, 0.0
        %282 = vadd.xlane.f32.xlu0 %v281
        %v283 = vpop.xlane.xlu0 %282
        %v284 = vmul.f32 %v272, 0.03125
        %v285 = vmul.f32 %v275, 0.03125
        %v286 = vmul.f32 %v280, 0.03125
        %v287 = vmul.f32 %v283, 0.03125
        %v288 = vmul.f32 %v284, %v284
        %v289 = vmul.f32 %v285, %v285
        %v290 = vsub.f32 %v286, %v288
        %v291 = vsub.f32 %v287, %v289
        %v292 = vadd.f32 %v290, 1e-05
        %v293 = vadd.f32 %v291, 1e-05
        %v294 = vrsqrt.pop %v292
        %v295 = vrsqrt.pop %v293
        %v296 = vlaneseq
        %v297 = vshrl.u32 %v296, 7
        %v298 = vsub.s32 1, %v297
        %v299 = vrot.slane %v182, %v298
        %v300 = vmul.f32 %v294, %v299
        %v301 = vmul.f32 %v295, %v299
        %v302 = vsub.f32 %v261, %v284
        %v303 = vsub.f32 %v266, %v285
        %v304 = vmul.f32 %v302, %v300
        %v305 = vmul.f32 %v303, %v301
        %v306 = vlaneseq
        %v307 = vshrl.u32 %v306, 7
        %v308 = vsub.s32 2, %v307
        %v309 = vrot.slane %v182, %v308
        %v310 = vadd.f32 %v304, %v309
        %v311 = vadd.f32 %v305, %v309
        %312 = vst.msk [vmem:[%s164] sm:$0xff] %vm269, %v310
        %313 = vst.msk [vmem:[%s164 + $0x8] sm:$0xff] %vm269, %v311
        %s314 = sand.u32 %s93, 1
        %s315 = scalar_lea.sflag [#allocation3], %s314
        %s316 = sand.u32 %s93, 1
        %s317 = smul.addr %s316, 16
        %s318 = scalar_lea.vmem [#allocation2], %s317
        // Predicated region
        $region33: #{tpu_custom_call.1} parent=31 // pred_check
          %p319 = pneg %p103
        $region34: #{tpu_custom_call.1} parent=31 // pred_check_branch
          %321 = sbr.rel (%p319) target = $region36
        $region35: #{tpu_custom_call.1} parent=31 // pred_region
          %s322 = smul.u32 2, %s17
          %s324 = ssub.s32 256, 256
          %325 = vsyncadd %s315, %s324
          %s326 = smul.addr %s322, 128
          %s327 = scalar_lea.hbm %s3, %s326
          %s328 = sshll.u32 %s318, 4
          %s329 = int_to_ptr.vmem [resolvable:$true] %s328
          %334 = dma.vmem_to_hbm [thread:$0]  %s329, 256, %s327, %s315, 128, 128, 8
        $region36: #{tpu_custom_call.1} parent=31 // pred_fallthru
          _
      $region32: #{tpu_custom_call.1} parent=5 // pred_fallthru
        _
      %p335 = scmp.le.s32.totalorder 2, %s12
      // Predicated region
      $region37: #{tpu_custom_call.1} parent=5 // pred_check
        %p336 = pneg %p335
      $region38: #{tpu_custom_call.1} parent=5 // pred_check_branch
        %338 = sbr.rel (%p336) target = $region40
      $region39: #{tpu_custom_call.1} parent=5 // pred_region
        %s339 = ssub.s32 %s12, 2
        // Predicated region
        $region41: #{tpu_custom_call.1} parent=39 // pred_check
          %p340 = pneg %p109
        $region42: #{tpu_custom_call.1} parent=39 // pred_check_branch
          %342 = sbr.rel (%p340) target = $region44
        $region43: #{tpu_custom_call.1} parent=39 // pred_region
          %s343 = sand.u32 %s94, 1
          %s344 = scalar_lea.sflag [#allocation3], %s343
          %s345 = sand.u32 %s94, 1
          %s346 = smul.addr %s345, 16
          %s347 = scalar_lea.vmem [#allocation2], %s346
          %348 = dma.done %s344, 256
        $region44: #{tpu_custom_call.1} parent=39 // pred_fallthru
          _
      $region40: #{tpu_custom_call.1} parent=5 // pred_fallthru
        _
    $region6: #{tpu_custom_call.1} parent=1 // loop_footer
      %s16 = sadd.s32 1, %s12
    $region7: #{tpu_custom_call.1} parent=1 // loop_footer_branch
      %11 = sbr.rel target = $region3
    $region8: #{tpu_custom_call.1} parent=1 // loop_exit
      _
    %349 = vsyncpa [#allocation3], 1
    %s350 = scalar_lea.sflag [#allocation3], 1
    %351 = vsyncpa %s350, 1

</llo_original>
